<compile_context>
chip_gen: v6e
topology: v6e:2x2x1
jax: 0.10.0
libtpu: 0.0.40
codegen_flags: <defaults>
</compile_context>

<pallas_src>
import functools

import jax
import jax.numpy as jnp
from jax.experimental import pallas as pl
from jax.experimental.pallas import tpu as pltpu


# All operands are tiny at these shapes -> whole-array VMEM residency,
# no blocking/double-buffering needed.
_VMEM = pl.BlockSpec(memory_space=pltpu.MemorySpace.VMEM)


def _dense_kernel(x_ref, w_ref, b_ref, o_ref, *, relu):
    """o = [relu](x @ w + b) — one batched MXU matmul over all T*B rows."""
    y = jnp.dot(x_ref[...], w_ref[...], preferred_element_type=jnp.float32)
    y = y + b_ref[...]
    if relu:
        y = jnp.maximum(y, 0.0)
    o_ref[...] = y.astype(o_ref.dtype)


def _dense(x2d, w, b, *, relu):
    m = x2d.shape[0]
    n = w.shape[1]
    return pl.pallas_call(
        functools.partial(_dense_kernel, relu=relu),
        out_shape=jax.ShapeDtypeStruct((m, n), jnp.float32),
        in_specs=[_VMEM, _VMEM, _VMEM],
        out_specs=_VMEM,
    )(x2d, w, b)


def _gru_recurrence_kernel(gi_ref, h0_ref, whh_ref, bhn_ref, rnn_ref):
    """Sequential GRU over T inside one kernel invocation.

    gi_ref : (T, B, 3H)  precomputed x @ W_ih^T + b_ih (+ b_hh for r/z gates)
    h0_ref : (B, H)      initial hidden state
    whh_ref: (H, 3H)     W_hh^T
    bhn_ref: (1, H)      b_hh slice for the n gate
    rnn_ref: (T, B, H)   output: all hidden states (time-major)
    """
    T = gi_ref.shape[0]
    H = h0_ref.shape[1]

    # Load time-invariant operands once, outside the serial loop.
    w_hh = whh_ref[...]
    b_hn = bhn_ref[...]

    def step(t, h):
        gi = gi_ref[t]                                             # (B, 3H)
        gh = jnp.dot(h, w_hh, preferred_element_type=jnp.float32)  # (B, 3H)
        # PyTorch GRU gate layout: [r | z | n].
        r = jax.nn.sigmoid(gi[:, 0:H] + gh[:, 0:H])
        z = jax.nn.sigmoid(gi[:, H:2 * H] + gh[:, H:2 * H])
        n = jnp.tanh(gi[:, 2 * H:3 * H] + r * (gh[:, 2 * H:3 * H] + b_hn))
        h_new = (1.0 - z) * n + z * h
        rnn_ref[t] = h_new
        return h_new

    jax.lax.fori_loop(0, T, step, h0_ref[...], unroll=True)


def goal_rnn_forward(x, hn, seq_lens, params):
    """x: (B, T, I) f32, hn: (1, B, H) f32. Returns (relu(linear(rnn_out)), rnn_out)."""
    del seq_lens  # unused, matching the reference forward
    B, T, I = x.shape
    H = hn.shape[-1]
    O = params["w_out"].shape[1]

    # Fold biases once (wrapper side): gi carries b_ih plus the r/z slices of
    # b_hh; the n gate keeps b_hh_n inside r * (W_hn h + b_hn) per PyTorch.
    b_hh = params["b_hh"]                                           # (1, 3H)
    b_gi = params["b_ih"] + jnp.concatenate(
        [b_hh[:, :2 * H], jnp.zeros((1, H), b_hh.dtype)], axis=1)   # (1, 3H)
    b_hn = b_hh[:, 2 * H:]                                          # (1, H)

    # (1) Input-gate matmul, hoisted off the serial chain (time-major rows).
    x_flat = jnp.transpose(x, (1, 0, 2)).reshape(T * B, I)
    gi = _dense(x_flat, params["w_ih"], b_gi, relu=False).reshape(T, B, 3 * H)

    # (2) Sequential recurrence: one kernel invocation, unrolled time loop.
    rnn_tm = pl.pallas_call(
        _gru_recurrence_kernel,
        out_shape=jax.ShapeDtypeStruct((T, B, H), jnp.float32),
        in_specs=[_VMEM, _VMEM, _VMEM, _VMEM],
        out_specs=_VMEM,
    )(gi, hn[0], params["w_hh"], b_hn)

    # (3) Output head (Linear + ReLU), hoisted out of the loop: one batched matmul.
    y_flat = _dense(rnn_tm.reshape(T * B, H), params["w_out"], params["b_out"],
                    relu=True)

    y = jnp.transpose(y_flat.reshape(T, B, O), (1, 0, 2))           # (B, T, O)
    rnn_out = jnp.transpose(rnn_tm, (1, 0, 2))                      # (B, T, H)
    return y, rnn_out


def init_params(key, inp_dim, hid_dim, out_dim):
    """Deterministic synthetic init, PyTorch-shaped then converted for the kernel."""
    ks = jax.random.split(key, 6)
    bound_g = 1.0 / jnp.sqrt(hid_dim)
    bound_l = 1.0 / jnp.sqrt(hid_dim)
    # PyTorch shapes: weight_ih (3H, I), weight_hh (3H, H), biases (3H,)
    w_ih_pt = jax.random.uniform(ks[0], (3 * hid_dim, inp_dim), jnp.float32, -bound_g, bound_g)
    w_hh_pt = jax.random.uniform(ks[1], (3 * hid_dim, hid_dim), jnp.float32, -bound_g, bound_g)
    b_ih_pt = jax.random.uniform(ks[2], (3 * hid_dim,), jnp.float32, -bound_g, bound_g)
    b_hh_pt = jax.random.uniform(ks[3], (3 * hid_dim,), jnp.float32, -bound_g, bound_g)
    # Linear: weight (O, H), bias (O,)
    w_out_pt = jax.random.uniform(ks[4], (out_dim, hid_dim), jnp.float32, -bound_l, bound_l)
    b_out_pt = jax.random.uniform(ks[5], (out_dim,), jnp.float32, -bound_l, bound_l)
    return {
        "w_ih": w_ih_pt.T,                 # (I, 3H)
        "w_hh": w_hh_pt.T,                 # (H, 3H)
        "b_ih": b_ih_pt.reshape(1, -1),    # (1, 3H)
        "b_hh": b_hh_pt.reshape(1, -1),    # (1, 3H)
        "w_out": w_out_pt.T,               # (H, O)
        "b_out": b_out_pt.reshape(1, -1),  # (1, O)
    }


def reference_forward(x, hn, params):
    """Pure-JAX reference reproducing torch GRU + Linear + ReLU semantics."""
    H = hn.shape[-1]
    w_ih, w_hh = params["w_ih"], params["w_hh"]
    b_ih, b_hh = params["b_ih"][0], params["b_hh"][0]

    def step(h, x_t):
        gi = x_t @ w_ih + b_ih
        gh = h @ w_hh + b_hh
        r = jax.nn.sigmoid(gi[:, :H] + gh[:, :H])
        z = jax.nn.sigmoid(gi[:, H:2 * H] + gh[:, H:2 * H])
        n = jnp.tanh(gi[:, 2 * H:] + r * gh[:, 2 * H:])
        h_new = (1.0 - z) * n + z * h
        return h_new, h_new

    _, hs = jax.lax.scan(step, hn[0], jnp.transpose(x, (1, 0, 2)))
    rnn_out = jnp.transpose(hs, (1, 0, 2))
    y = jnp.maximum(rnn_out @ params["w_out"] + params["b_out"][0], 0.0)
    return y, rnn_out


if __name__ == "__main__":
    B, T, INP, HID, OUT = 2, 8, 32, 32, 16

    key = jax.random.PRNGKey(0)
    k_x, k_h, k_p = jax.random.split(key, 3)
    x = jax.random.normal(k_x, (B, T, INP), jnp.float32)
    hn = jax.random.normal(k_h, (1, B, HID), jnp.float32)
    seq_lens = jnp.full((B,), T, jnp.int32)  # present to mirror signature; unused
    params = init_params(k_p, INP, HID, OUT)

    y, rnn_out = goal_rnn_forward(x, hn, seq_lens, params)
    y = jax.block_until_ready(y)
    rnn_out = jax.block_until_ready(rnn_out)

    y_ref, rnn_ref = reference_forward(x, hn, params)
    assert y.shape == (B, T, OUT) and rnn_out.shape == (B, T, HID)
    assert jnp.allclose(y, y_ref, atol=1e-5, rtol=1e-5)
    assert jnp.allclose(rnn_out, rnn_ref, atol=1e-5, rtol=1e-5)

    print("KERNEL_OK")
</pallas_src>

<mosaic_0001>
module attributes {stable_mosaic.version = 11 : i64} {
  func.func @_dense_kernel(%arg0: memref<16x32xf32, #tpu.memory_space<vmem>>, %arg1: memref<32x96xf32, #tpu.memory_space<vmem>>, %arg2: memref<1x96xf32, #tpu.memory_space<vmem>>, %arg3: memref<16x96xf32, #tpu.memory_space<vmem>>) attributes {dimension_semantics = [], scalar_prefetch = 0 : i64, scratch_operands = 0 : i64, tpu.core_type = #tpu.core_type<tc>} {
    %c0 = arith.constant 0 : index
    %c0_0 = arith.constant 0 : index
    %0 = vector.load %arg0[%c0, %c0_0] : memref<16x32xf32, #tpu.memory_space<vmem>>, vector<16x32xf32>
    %c0_1 = arith.constant 0 : index
    %c0_2 = arith.constant 0 : index
    %1 = vector.load %arg1[%c0_1, %c0_2] : memref<32x96xf32, #tpu.memory_space<vmem>>, vector<32x96xf32>
    %cst = arith.constant dense<0.000000e+00> : vector<16x96xf32>
    %2 = tpu.matmul %0, %1, %cst {dimension_numbers = #tpu.dot_dimension_numbers<[1], [0], [0], [1], [0, 0, 1, 1], [], []>} : vector<16x32xf32>, vector<32x96xf32>, vector<16x96xf32> -> vector<16x96xf32>
    %c0_3 = arith.constant 0 : index
    %c0_4 = arith.constant 0 : index
    %3 = vector.load %arg2[%c0_3, %c0_4] : memref<1x96xf32, #tpu.memory_space<vmem>>, vector<1x96xf32>
    %4 = vector.broadcast %3 : vector<1x96xf32> to vector<16x96xf32>
    %5 = arith.addf %2, %4 : vector<16x96xf32>
    %c0_5 = arith.constant 0 : index
    %c0_6 = arith.constant 0 : index
    %6 = vector.load %arg3[%c0_5, %c0_6] : memref<16x96xf32, #tpu.memory_space<vmem>>, vector<16x96xf32>
    tpu.vector_store %arg3[%c0_5, %c0_6], %5 {strides = array<i32>} : memref<16x96xf32, #tpu.memory_space<vmem>>, vector<16x96xf32>,
    return
  }
}

</mosaic_0001>

<llo_original>
// kernel: tpu_custom_call.1
$region0: #{tpu_custom_call.1}
  #allocation0 [shape = 'u32[]', space=smem, size = 0x4, offset = 0x4, fixed_abs, tag = 'smem constant byte address 0x4 - core index']
  #allocation1 [shape = 'u32[144,128]{1,0:T(1,128)}', space=vmem, size = 0x12000, scoped, tag = 'internal scratch']
  %s0 = inlined_call_operand.hbm [shape: f32[16,32], index: 0, kind: input, shape index: {}]
  %s1 = inlined_call_operand.hbm [shape: f32[32,96], index: 1, kind: input, shape index: {}]
  %s2 = inlined_call_operand.vmem [shape: f32[1,96], index: 2, kind: input, shape index: {}]
  %s3 = inlined_call_operand.hbm [shape: f32[16,96], index: 3, kind: output, shape index: {}]
  %s4 = sld [smem:[#allocation0]]
  $region30: #{tpu_custom_call.1} parent=0
    _
  %s6 = ssub.s32 1, %s4
  %s7 = scalar_select 0, %s6, %s4
  $region1: #{tpu_custom_call.1} parent=0
    #allocation2 [shape = 'u8[8192]{0}', space=vmem, size = 0x2000, scoped, tag = 'input window, operand 0, single buffered']
    #allocation3 [shape = 's32[1]{0}', space=sflag, size = 0x4, scoped, tag = 'scoped memory for tpu_custom_call.1']
    #allocation4 [shape = 's32[1]{0}', space=sflag, size = 0x4, scoped, tag = 'scoped memory for tpu_custom_call.1']
    #allocation5 [shape = 'u8[16384]{0}', space=vmem, size = 0x4000, scoped, tag = 'input window, operand 1, single buffered']
    #allocation6 [shape = 's32[1]{0}', space=sflag, size = 0x4, scoped, tag = 'scoped memory for tpu_custom_call.1']
    #allocation7 [shape = 'u8[8192]{0}', space=vmem, size = 0x2000, scoped, tag = 'output window, operand 0, single buffered']
    %8 = vsyncpa [#allocation3], 0
    %9 = vsyncpa [#allocation6], 0
    %10 = vsyncpa [#allocation4], 0
    // Predicated region
    $region2: #{tpu_custom_call.1} parent=1 // pred_check
      _
    $region3: #{tpu_custom_call.1} parent=1 // pred_check_branch
      %12 = sbr.rel (0) target = $region5
    $region4: #{tpu_custom_call.1} parent=1 // pred_region
      %s14 = ssub.s32 256, 256
      %15 = vsyncadd [#allocation3], %s14
      %s16 = sshll.u32 [#allocation2], 4
      %s17 = int_to_ptr.vmem [resolvable:$true] %s16
      %22 = dma.hbm_to_vmem [thread:$0]  %s0, 256, %s17, [#allocation3], 128, 128, 8
    $region5: #{tpu_custom_call.1} parent=1 // pred_fallthru
      _
    // Predicated region
    $region6: #{tpu_custom_call.1} parent=1 // pred_check
      _
    $region7: #{tpu_custom_call.1} parent=1 // pred_check_branch
      %24 = sbr.rel (0) target = $region9
    $region8: #{tpu_custom_call.1} parent=1 // pred_region
      %s26 = ssub.s32 512, 512
      %27 = vsyncadd [#allocation6], %s26
      %s28 = sshll.u32 [#allocation5], 4
      %s29 = int_to_ptr.vmem [resolvable:$true] %s28
      %34 = dma.hbm_to_vmem [thread:$0]  %s1, 512, %s29, [#allocation6], 128, 128, 8
    $region9: #{tpu_custom_call.1} parent=1 // pred_fallthru
      _
    // Predicated region
    $region10: #{tpu_custom_call.1} parent=1 // pred_check
      _
    $region11: #{tpu_custom_call.1} parent=1 // pred_check_branch
      %36 = sbr.rel (0) target = $region13
    $region12: #{tpu_custom_call.1} parent=1 // pred_region
      _
    $region13: #{tpu_custom_call.1} parent=1 // pred_fallthru
      _
    // Predicated region
    $region14: #{tpu_custom_call.1} parent=1 // pred_check
      _
    $region15: #{tpu_custom_call.1} parent=1 // pred_check_branch
      %38 = sbr.rel (0) target = $region17
    $region16: #{tpu_custom_call.1} parent=1 // pred_region
      %39 = dma.done [#allocation3], 256
    $region17: #{tpu_custom_call.1} parent=1 // pred_fallthru
      _
    // Predicated region
    $region18: #{tpu_custom_call.1} parent=1 // pred_check
      _
    $region19: #{tpu_custom_call.1} parent=1 // pred_check_branch
      %41 = sbr.rel (0) target = $region21
    $region20: #{tpu_custom_call.1} parent=1 // pred_region
      %42 = dma.done [#allocation6], 512
    $region21: #{tpu_custom_call.1} parent=1 // pred_fallthru
      _
    %v43 = vld [vmem:[#allocation2] sm:$0xff]
    %v44 = vld [vmem:[#allocation2 + $0x8] sm:$0xff]
    %v45 = vld [vmem:[#allocation5] sm:$0xff]
    %v46 = vld [vmem:[#allocation5 + $0x8] sm:$0xff]
    %v47 = vld [vmem:[#allocation5 + $0x10] sm:$0xff]
    %v48 = vld [vmem:[#allocation5 + $0x18] sm:$0xff]
    %v49 = vld [vmem:[%s2] sm:$0x1]
    %v51 = vlaneseq
    %v52 = vshrl.u32 %v51, 7
    %v53 = vsub.s32 0, %v52
    %v54 = vrot.slane %v49, %v53
    %vm56 = vcmask 261120
    %v58 = vsel %vm56, %v43, 0
    %v61 = vsel %vm56, %v44, 0
    %63 = vmatprep.subr.mxu0 0.0
    %64 = vmatpush1.msra.mxu0 0.0
    %65 = vmatprep.subr.mxu0 0.0
    %66 = vmatpush1.msra.mxu0 0.0
    %67 = vmatprep.subr.mxu0 0.0
    %68 = vmatpush1.msra.mxu0 0.0
    %69 = vmatprep.subr.mxu0 0.0
    %70 = vmatpush1.msra.mxu0 0.0
    %71 = vmatprep.subr.mxu0 0.0
    %72 = vmatpush1.msra.mxu0 0.0
    %73 = vmatprep.subr.mxu0 0.0
    %74 = vmatpush1.msra.mxu0 0.0
    %75 = vmatprep.subr.mxu0 0.0
    %76 = vmatpush1.msra.mxu0 0.0
    %77 = vmatprep.subr.mxu0 0.0
    %78 = vmatpush1.msra.mxu0 0.0
    %79 = vmatprep.subr.mxu0 0.0
    %80 = vmatpush1.msra.mxu0 0.0
    %81 = vmatprep.subr.mxu0 0.0
    %82 = vmatpush1.msra.mxu0 0.0
    %83 = vmatprep.subr.mxu0 0.0
    %84 = vmatpush1.msra.mxu0 0.0
    %85 = vmatprep.subr.mxu0 0.0
    %86 = vmatpush1.msra.mxu0 0.0
    %87 = vmatprep.subr.mxu0 0.0
    %88 = vmatpush1.msra.mxu0 %v48
    %89 = vmatprep.subr.mxu0 0.0
    %90 = vmatpush1.msra.mxu0 %v47
    %91 = vmatprep.subr.mxu0 0.0
    %92 = vmatpush1.msra.mxu0 %v46
    %93 = vmatprep.subr.mxu0 0.0
    %94 = vmatpush1.msra.mxu0 %v45
    %95 = vmatprep.subr.mxu0 0.0
    %96 = vmatpush2.msra.mxu0 0.0
    %97 = vmatprep.subr.mxu0 0.0
    %98 = vmatpush2.msra.mxu0 0.0
    %99 = vmatprep.subr.mxu0 0.0
    %100 = vmatpush2.msra.mxu0 0.0
    %101 = vmatprep.subr.mxu0 0.0
    %102 = vmatpush2.msra.mxu0 0.0
    %103 = vmatprep.subr.mxu0 0.0
    %104 = vmatpush2.msra.mxu0 0.0
    %105 = vmatprep.subr.mxu0 0.0
    %106 = vmatpush2.msra.mxu0 0.0
    %107 = vmatprep.subr.mxu0 0.0
    %108 = vmatpush2.msra.mxu0 0.0
    %109 = vmatprep.subr.mxu0 0.0
    %110 = vmatpush2.msra.mxu0 0.0
    %111 = vmatprep.subr.mxu0 0.0
    %112 = vmatpush2.msra.mxu0 0.0
    %113 = vmatprep.subr.mxu0 0.0
    %114 = vmatpush2.msra.mxu0 0.0
    %115 = vmatprep.subr.mxu0 0.0
    %116 = vmatpush2.msra.mxu0 0.0
    %117 = vmatprep.subr.mxu0 0.0
    %118 = vmatpush2.msra.mxu0 0.0
    %119 = vmatprep.subr.mxu0 0.0
    %120 = vmatpush2.msra.mxu0 0.0
    %121 = vmatprep.subr.mxu0 0.0
    %122 = vmatpush2.msra.mxu0 0.0
    %123 = vmatprep.subr.mxu0 0.0
    %124 = vmatpush2.msra.mxu0 0.0
    %125 = vmatprep.subr.mxu0 0.0
    %126 = vmatpush2.msra.mxu0 0.0
    %127 = vmatprep.mubr.f32.mxu0 0.0
    %128 = vmatmul.mubr.f32.gmra.mxu0 %v58
    %v129 = vpop.f32.mrf.mxu0
    %v130 = vadd.f32 %v54, %v129
    %v131 = vpop.f32.mrf.mxu0
    %132 = vmatprep.mubr.f32.mxu0 0.0
    %133 = vmatmul.mubr.f32.gmra.mxu0 %v61
    %v134 = vpop.f32.mrf.mxu0
    %v135 = vadd.f32 %v54, %v134
    %v136 = vpop.f32.mrf.mxu0
    %137 = vdwg.mxu0
    %vm138 = vcmask 785408
    %139 = vst.msk [vmem:[#allocation7] sm:$0xff] %vm138, %v130
    %140 = vst.msk [vmem:[#allocation7 + $0x8] sm:$0xff] %vm138, %v135
    // Predicated region
    $region22: #{tpu_custom_call.1} parent=1 // pred_check
      _
    $region23: #{tpu_custom_call.1} parent=1 // pred_check_branch
      %142 = sbr.rel (0) target = $region25
    $region24: #{tpu_custom_call.1} parent=1 // pred_region
      %s144 = ssub.s32 256, 256
      %145 = vsyncadd [#allocation4], %s144
      %s146 = sshll.u32 [#allocation7], 4
      %s147 = int_to_ptr.vmem [resolvable:$true] %s146
      %152 = dma.vmem_to_hbm [thread:$0]  %s147, 256, %s3, [#allocation4], 128, 128, 8
    $region25: #{tpu_custom_call.1} parent=1 // pred_fallthru
      _
    // Predicated region
    $region26: #{tpu_custom_call.1} parent=1 // pred_check
      _
    $region27: #{tpu_custom_call.1} parent=1 // pred_check_branch
      %154 = sbr.rel (0) target = $region29
    $region28: #{tpu_custom_call.1} parent=1 // pred_region
      %155 = dma.done [#allocation4], 256
    $region29: #{tpu_custom_call.1} parent=1 // pred_fallthru
      _
    %156 = vsyncpa [#allocation3], 1
    %157 = vsyncpa [#allocation6], 1
    %158 = vsyncpa [#allocation4], 1

</llo_original>
